<compile_context>
chip_gen: v7x
topology: tpu7x:2x2x1
jax: 0.10.0
libtpu: 0.0.40
codegen_flags: <defaults>
</compile_context>

<pallas_src>
import functools

import jax
import jax.numpy as jnp
from jax.experimental import pallas as pl
from jax.experimental.pallas import tpu as pltpu

ALPHA = 0.25
GAMMA = 2.0
LANES = 128
ROW_TILE = 32  # int8 sublane tile -> keep block rows a multiple of 32


def focal_loss_kernel(d_ref, t_ref, o_ref, *, alpha, gamma):
    # d_ref: (BR, 128) logit gap d = x1 - x0 (native dtype, cast to f32 here)
    # t_ref: (BR, 128) int8 targets in {0, 1}
    # o_ref: (BR, 128) f32 per-example loss
    d = d_ref[...].astype(jnp.float32)
    t = t_ref[...].astype(jnp.int32)        # widen in-reg; cost hidden under DMA
    is_cls0 = (t == 0)

    # Binary log-softmax: log p0 = -softplus(d), log p1 = -softplus(-d).
    # Select the picked class first, then one softplus + one exp total.
    z = jnp.where(is_cls0, d, -d)                       # (other - picked) logit gap
    e = jnp.exp(-jnp.abs(z))                            # EUP
    lp = -(jnp.maximum(z, 0.0) + jnp.log1p(e))          # log_prob of picked class
    p = jnp.exp(lp)                                     # prob of picked class
    q = 1.0 - p

    # Focal modulation (1 - p)^gamma; gamma is a static Python float.
    g = float(gamma)
    if g == 2.0:
        modf = q * q
    elif g == int(g) and g >= 0.0:
        modf = jnp.ones_like(q)
        for _ in range(int(g)):
            modf = modf * q
    else:
        modf = q ** jnp.float32(g)

    w = jnp.where(is_cls0, jnp.float32(alpha), jnp.float32(1.0 - alpha))
    o_ref[...] = (-w * modf * lp).astype(o_ref.dtype)


def _round_up(a, b):
    return -(-a // b) * b


def _pad_1d(x, n_pad):
    # Single-write pad: dynamic_update_slice into a zeros buffer (fuses upstream
    # elementwise producers), instead of jnp.pad's extra full-array copy.
    n = x.shape[0]
    if n == n_pad:
        return x
    buf = jnp.zeros((n_pad,), x.dtype)
    return jax.lax.dynamic_update_slice(buf, x, (0,))


def focal_loss(logits, targets, *, alpha=ALPHA, gamma=GAMMA, block_rows=2048):
    """logits: (N, 2); targets: (N,) int in {0,1}. Returns (N,) f32 per-example loss."""
    N, C = logits.shape
    assert C == 2, "FocalLoss weight has 2 entries -> binary classification"
    assert block_rows % ROW_TILE == 0, "block_rows must be a multiple of 32"

    rows = -(-N // LANES)  # ceil(N / 128) lane-dense rows

    # Pick a balanced block count: at least ceil(rows / block_rows), and >= 2 when
    # there is enough work so the parallel grid shards across both v7x TCs.
    nblocks = max(-(-rows // block_rows), 2 if rows >= 2 * ROW_TILE else 1)
    br = _round_up(-(-rows // nblocks), ROW_TILE)       # block rows, multiple of 32
    nblocks = -(-rows // br)                            # recompute after rounding
    rows_pad = nblocks * br
    n_pad = rows_pad * LANES

    # Kernel inputs: logit gap d (native dtype) and int8 targets — 5 B/example (f32)
    # instead of the previous 12 B (two f32 planes + int32 targets).
    d = logits[:, 1] - logits[:, 0]
    t = targets.astype(jnp.int8)
    d = _pad_1d(d, n_pad).reshape(rows_pad, LANES)
    t = _pad_1d(t, n_pad).reshape(rows_pad, LANES)

    kernel = functools.partial(focal_loss_kernel, alpha=alpha, gamma=gamma)

    in_bytes = n_pad * (d.dtype.itemsize + 1)
    out_bytes = n_pad * 4
    cost = pl.CostEstimate(
        flops=12 * n_pad,
        transcendentals=3 * n_pad,
        bytes_accessed=in_bytes + out_bytes,
    )

    out = pl.pallas_call(
        kernel,
        out_shape=jax.ShapeDtypeStruct((rows_pad, LANES), jnp.float32),
        grid_spec=pltpu.PrefetchScalarGridSpec(
            num_scalar_prefetch=0,
            grid=(nblocks,),
            in_specs=[
                pl.BlockSpec((br, LANES), lambda i: (i, 0)),
                pl.BlockSpec((br, LANES), lambda i: (i, 0)),
            ],
            out_specs=pl.BlockSpec((br, LANES), lambda i: (i, 0)),
        ),
        compiler_params=pltpu.CompilerParams(
            dimension_semantics=("parallel",),
        ),
        cost_estimate=cost,
    )(d, t)

    out = out.reshape(n_pad)
    if n_pad == N:
        return out            # skip the extra slice copy when already aligned
    return out[:N]


def focal_loss_ref(logits, targets, *, alpha=ALPHA, gamma=GAMMA):
    """Pure-JAX reference mirroring the PyTorch forward (reduction='none')."""
    log_prob = jax.nn.log_softmax(logits.astype(jnp.float32), axis=-1)
    prob = jnp.exp(log_prob)
    mod = ((1.0 - prob) ** gamma) * log_prob
    weight = jnp.array([alpha, 1.0 - alpha], dtype=jnp.float32)
    picked = jnp.take_along_axis(mod, targets[:, None].astype(jnp.int32), axis=-1)[:, 0]
    w = weight[targets.astype(jnp.int32)]
    return -w * picked


if __name__ == "__main__":
    key = jax.random.PRNGKey(0)
    k1, k2, k3, k4, k5, k6 = jax.random.split(key, 6)
    C = 2

    # Lane-aligned small case.
    N = 256
    logits = jax.random.normal(k1, (N, C), dtype=jnp.float32)
    targets = jax.random.randint(k2, (N,), 0, C, dtype=jnp.int32)
    out = jax.block_until_ready(focal_loss(logits, targets))
    ref = focal_loss_ref(logits, targets)
    assert out.shape == (N,)
    assert jnp.allclose(out, ref, atol=1e-5, rtol=1e-5), "mismatch vs reference (N=256)"

    # Non-aligned N exercises the padded-tail path.
    N2 = 200
    logits2 = jax.random.normal(k3, (N2, C), dtype=jnp.float32)
    targets2 = jax.random.randint(k4, (N2,), 0, C, dtype=jnp.int32)
    out2 = jax.block_until_ready(focal_loss(logits2, targets2))
    ref2 = focal_loss_ref(logits2, targets2)
    assert out2.shape == (N2,)
    assert jnp.allclose(out2, ref2, atol=1e-5, rtol=1e-5), "mismatch vs reference (N=200)"

    # Medium case exercising the >=2-block (v7x megacore) grid split with int8 targets.
    N3 = 16384 + 100
    logits3 = jax.random.normal(k5, (N3, C), dtype=jnp.float32)
    targets3 = jax.random.randint(k6, (N3,), 0, C, dtype=jnp.int32)
    out3 = jax.block_until_ready(focal_loss(logits3, targets3))
    ref3 = focal_loss_ref(logits3, targets3)
    assert out3.shape == (N3,)
    assert jnp.allclose(out3, ref3, atol=1e-5, rtol=1e-5), "mismatch vs reference (N=16484)"

    # Multi-block path with a small forced block size.
    out4 = jax.block_until_ready(focal_loss(logits3, targets3, block_rows=32))
    assert jnp.allclose(out4, ref3, atol=1e-5, rtol=1e-5), "mismatch vs reference (multi-block)"

    print("KERNEL_OK")
</pallas_src>

<mosaic_0001>
module attributes {stable_mosaic.version = 11 : i64} {
  func.func @focal_loss_kernel(%arg0: i32, %arg1: memref<32x128xf32, #tpu.memory_space<vmem>>, %arg2: memref<32x128xi8, #tpu.memory_space<vmem>>, %arg3: memref<32x128xf32, #tpu.memory_space<vmem>>) attributes {dimension_semantics = [#tpu.dimension_semantics<parallel>], iteration_bounds = array<i64: 1>, scalar_prefetch = 0 : i64, scratch_operands = 0 : i64, tpu.core_type = #tpu.core_type<tc>, window_params = [{transform_indices = @transform_0, window_bounds = array<i64: 32, 128>}, {transform_indices = @transform_1, window_bounds = array<i64: 32, 128>}, {transform_indices = @transform_2, window_bounds = array<i64: 32, 128>}]} {
    %c0 = arith.constant 0 : index
    %c0_0 = arith.constant 0 : index
    %0 = vector.load %arg1[%c0, %c0_0] : memref<32x128xf32, #tpu.memory_space<vmem>>, vector<32x128xf32>
    %c0_1 = arith.constant 0 : index
    %c0_2 = arith.constant 0 : index
    %1 = vector.load %arg2[%c0_1, %c0_2] : memref<32x128xi8, #tpu.memory_space<vmem>>, vector<32x128xi8>
    %2 = arith.extsi %1 : vector<32x128xi8> to vector<32x128xi32>
    %c0_i32 = arith.constant 0 : i32
    %3 = vector.broadcast %c0_i32 : i32 to vector<32x128xi32>
    %4 = arith.cmpi eq, %2, %3 : vector<32x128xi32>
    %cst = arith.constant 0.000000e+00 : f32
    %5 = vector.broadcast %cst : f32 to vector<32x128xf32>
    %6 = arith.subf %5, %0 : vector<32x128xf32>
    %7 = arith.select %4, %0, %6 : vector<32x128xi1>, vector<32x128xf32>
    %8 = math.absf %7 : vector<32x128xf32>
    %cst_3 = arith.constant 0.000000e+00 : f32
    %9 = vector.broadcast %cst_3 : f32 to vector<32x128xf32>
    %10 = arith.subf %9, %8 : vector<32x128xf32>
    %11 = math.exp %10 : vector<32x128xf32>
    %cst_4 = arith.constant 0.000000e+00 : f32
    %12 = vector.broadcast %cst_4 : f32 to vector<32x128xf32>
    %13 = arith.maximumf %7, %12 : vector<32x128xf32>
    %14 = math.log1p %11 : vector<32x128xf32>
    %15 = arith.addf %13, %14 : vector<32x128xf32>
    %cst_5 = arith.constant 0.000000e+00 : f32
    %16 = vector.broadcast %cst_5 : f32 to vector<32x128xf32>
    %17 = arith.subf %16, %15 : vector<32x128xf32>
    %18 = math.exp %17 : vector<32x128xf32>
    %cst_6 = arith.constant 1.000000e+00 : f32
    %19 = vector.broadcast %cst_6 : f32 to vector<32x128xf32>
    %20 = arith.subf %19, %18 : vector<32x128xf32>
    %21 = arith.mulf %20, %20 : vector<32x128xf32>
    %cst_7 = arith.constant 2.500000e-01 : f32
    %cst_8 = arith.constant 7.500000e-01 : f32
    %22 = vector.broadcast %cst_7 : f32 to vector<32x128xf32>
    %23 = vector.broadcast %cst_8 : f32 to vector<32x128xf32>
    %24 = arith.select %4, %22, %23 : vector<32x128xi1>, vector<32x128xf32>
    %cst_9 = arith.constant 0.000000e+00 : f32
    %25 = vector.broadcast %cst_9 : f32 to vector<32x128xf32>
    %26 = arith.subf %25, %24 : vector<32x128xf32>
    %27 = arith.mulf %26, %21 : vector<32x128xf32>
    %28 = arith.mulf %27, %17 : vector<32x128xf32>
    %c0_10 = arith.constant 0 : index
    %c0_11 = arith.constant 0 : index
    %29 = vector.load %arg3[%c0_10, %c0_11] : memref<32x128xf32, #tpu.memory_space<vmem>>, vector<32x128xf32>
    tpu.vector_store %arg3[%c0_10, %c0_11], %28 {strides = array<i32>} : memref<32x128xf32, #tpu.memory_space<vmem>>, vector<32x128xf32>,
    return
  }
  func.func @transform_0(%arg0: i32) -> (i32, i32) {
    %c0_i32 = arith.constant 0 : i32
    %c0_i32_0 = arith.constant 0 : i32
    return %arg0, %c0_i32 : i32, i32
  }
  func.func @transform_1(%arg0: i32) -> (i32, i32) {
    %c0_i32 = arith.constant 0 : i32
    %c0_i32_0 = arith.constant 0 : i32
    return %arg0, %c0_i32 : i32, i32
  }
  func.func @transform_2(%arg0: i32) -> (i32, i32) {
    %c0_i32 = arith.constant 0 : i32
    %c0_i32_0 = arith.constant 0 : i32
    return %arg0, %c0_i32 : i32, i32
  }
}

</mosaic_0001>

<llo_original>
// kernel: tpu_custom_call.1
$region0: #{tpu_custom_call.1}
  #allocation0 [shape = 'u32[]', space=smem, size = 0x4, offset = 0x4, fixed_abs, tag = 'smem constant byte address 0x4 - core index']
  #allocation1 [shape = 'u32[144,128]{1,0:T(1,128)}', space=vmem, size = 0x12000, scoped, tag = 'internal scratch']
  %s0 = inlined_call_operand.hbm [shape: f32[32,128], index: 0, kind: input, shape index: {}]
  %s1 = inlined_call_operand.hbm [shape: s8[32,128], index: 1, kind: input, shape index: {}]
  %s2 = inlined_call_operand.hbm [shape: f32[32,128], index: 2, kind: output, shape index: {}]
  %s3 = sld [smem:[#allocation0]]
  $region26: #{tpu_custom_call.1} parent=0
    _
  %s5 = ssub.s32 1, %s3
  %s6 = scalar_select 0, %s5, %s3
  $region1: #{tpu_custom_call.1} parent=0
    #allocation2 [shape = 'u8[16384]{0}', space=vmem, size = 0x4000, scoped, tag = 'input window, operand 0, single buffered']
    #allocation3 [shape = 's32[1]{0}', space=sflag, size = 0x4, scoped, tag = 'scoped memory for tpu_custom_call.1']
    #allocation4 [shape = 's32[1]{0}', space=sflag, size = 0x4, scoped, tag = 'scoped memory for tpu_custom_call.1']
    #allocation5 [shape = 'u8[4096]{0}', space=vmem, size = 0x1000, scoped, tag = 'input window, operand 1, single buffered']
    #allocation6 [shape = 's32[1]{0}', space=sflag, size = 0x4, scoped, tag = 'scoped memory for tpu_custom_call.1']
    #allocation7 [shape = 'u8[16384]{0}', space=vmem, size = 0x4000, scoped, tag = 'output window, operand 0, single buffered']
    %7 = vsyncpa [#allocation3], 0
    %8 = vsyncpa [#allocation6], 0
    %9 = vsyncpa [#allocation4], 0
    // Predicated region
    $region2: #{tpu_custom_call.1} parent=1 // pred_check
      _
    $region3: #{tpu_custom_call.1} parent=1 // pred_check_branch
      %11 = sbr.rel (0) target = $region5
    $region4: #{tpu_custom_call.1} parent=1 // pred_region
      %s13 = ssub.s32 512, 512
      %14 = vsyncadd [#allocation3], %s13
      %s15 = sshll.u32 [#allocation2], 4
      %s16 = int_to_ptr.vmem [resolvable:$true] %s15
      %21 = dma.hbm_to_vmem [thread:$0]  %s0, 512, %s16, [#allocation3], 128, 128, 8
    $region5: #{tpu_custom_call.1} parent=1 // pred_fallthru
      _
    // Predicated region
    $region6: #{tpu_custom_call.1} parent=1 // pred_check
      _
    $region7: #{tpu_custom_call.1} parent=1 // pred_check_branch
      %23 = sbr.rel (0) target = $region9
    $region8: #{tpu_custom_call.1} parent=1 // pred_region
      %s25 = ssub.s32 128, 128
      %26 = vsyncadd [#allocation6], %s25
      %s28 = sshll.u32 [#allocation5], 4
      %s29 = int_to_ptr.vmem [resolvable:$true] %s28
      %31 = dma.hbm_to_vmem [thread:$0]  %s1, 128, %s29, [#allocation6]
    $region9: #{tpu_custom_call.1} parent=1 // pred_fallthru
      _
    // Predicated region
    $region10: #{tpu_custom_call.1} parent=1 // pred_check
      _
    $region11: #{tpu_custom_call.1} parent=1 // pred_check_branch
      %33 = sbr.rel (0) target = $region13
    $region12: #{tpu_custom_call.1} parent=1 // pred_region
      %34 = dma.done [#allocation3], 512
    $region13: #{tpu_custom_call.1} parent=1 // pred_fallthru
      _
    // Predicated region
    $region14: #{tpu_custom_call.1} parent=1 // pred_check
      _
    $region15: #{tpu_custom_call.1} parent=1 // pred_check_branch
      %36 = sbr.rel (0) target = $region17
    $region16: #{tpu_custom_call.1} parent=1 // pred_region
      %37 = dma.done [#allocation6], 128
    $region17: #{tpu_custom_call.1} parent=1 // pred_fallthru
      _
    %v38 = vld [vmem:[#allocation2] sm:$0xff]
    %v39 = vld [vmem:[#allocation2 + $0x8] sm:$0xff]
    %v40 = vld [vmem:[#allocation2 + $0x10] sm:$0xff]
    %v41 = vld [vmem:[#allocation2 + $0x18] sm:$0xff]
    %v42 = vld [vmem:[#allocation5] sm:$0xff]
    %v43 = vunpack.c.0.s8 %v42
    %v44 = vunpack.c.1.s8 %v42
    %v45 = vunpack.c.2.s8 %v42
    %v46 = vunpack.c.3.s8 %v42
    %vm47 = vcmp.eq.s32.totalorder %v43, 0
    %vm48 = vcmp.eq.s32.totalorder %v44, 0
    %vm49 = vcmp.eq.s32.totalorder %v45, 0
    %vm50 = vcmp.eq.s32.totalorder %v46, 0
    %v51 = vsub.f32 0.0, %v38
    %v52 = vsub.f32 0.0, %v39
    %v53 = vsub.f32 0.0, %v40
    %v54 = vsub.f32 0.0, %v41
    %v55 = vsel %vm47, %v38, %v51
    %v56 = vsel %vm48, %v39, %v52
    %v57 = vsel %vm49, %v40, %v53
    %v58 = vsel %vm50, %v41, %v54
    %v59 = vand.u32 2147483647, %v55
    %v60 = vand.u32 2147483647, %v56
    %v61 = vand.u32 2147483647, %v57
    %v62 = vand.u32 2147483647, %v58
    %v63 = vsub.f32 0.0, %v59
    %v64 = vsub.f32 0.0, %v60
    %v65 = vsub.f32 0.0, %v61
    %v66 = vsub.f32 0.0, %v62
    %v67 = vmul.f32 %v63, 1.442695
    %v68 = vpow.pop %v67
    %v69 = vmul.f32 %v64, 1.442695
    %v70 = vpow.pop %v69
    %v71 = vmul.f32 %v65, 1.442695
    %v72 = vpow.pop %v71
    %v73 = vmul.f32 %v66, 1.442695
    %v74 = vpow.pop %v73
    %v75 = vmax.f32 %v55, 0.0
    %v76 = vmax.f32 %v56, 0.0
    %v77 = vmax.f32 %v57, 0.0
    %v78 = vmax.f32 %v58, 0.0
    %v79 = vadd.f32 %v68, 1.0
    %v80 = vlog2.pop %v79
    %v81 = vmul.f32 %v80, 0.6931472
    %v82 = vmul.f32 -0.5, %v68
    %v83 = vadd.f32 %v82, 1.0
    %v84 = vmul.f32 %v83, %v68
    %v85 = vand.u32 2147483647, %v68
    %vm86 = vcmp.lt.f32.partialorder %v85, 0.0004427343
    %v87 = vsel %vm86, %v84, %v81
    %v88 = vadd.f32 %v70, 1.0
    %v89 = vlog2.pop %v88
    %v90 = vmul.f32 %v89, 0.6931472
    %v91 = vmul.f32 -0.5, %v70
    %v92 = vadd.f32 %v91, 1.0
    %v93 = vmul.f32 %v92, %v70
    %v94 = vand.u32 2147483647, %v70
    %vm95 = vcmp.lt.f32.partialorder %v94, 0.0004427343
    %v96 = vsel %vm95, %v93, %v90
    %v97 = vadd.f32 %v72, 1.0
    %v98 = vlog2.pop %v97
    %v99 = vmul.f32 %v98, 0.6931472
    %v100 = vmul.f32 -0.5, %v72
    %v101 = vadd.f32 %v100, 1.0
    %v102 = vmul.f32 %v101, %v72
    %v103 = vand.u32 2147483647, %v72
    %vm104 = vcmp.lt.f32.partialorder %v103, 0.0004427343
    %v105 = vsel %vm104, %v102, %v99
    %v106 = vadd.f32 %v74, 1.0
    %v107 = vlog2.pop %v106
    %v108 = vmul.f32 %v107, 0.6931472
    %v109 = vmul.f32 -0.5, %v74
    %v110 = vadd.f32 %v109, 1.0
    %v111 = vmul.f32 %v110, %v74
    %v112 = vand.u32 2147483647, %v74
    %vm113 = vcmp.lt.f32.partialorder %v112, 0.0004427343
    %v114 = vsel %vm113, %v111, %v108
    %v115 = vadd.f32 %v75, %v87
    %v116 = vadd.f32 %v76, %v96
    %v117 = vadd.f32 %v77, %v105
    %v118 = vadd.f32 %v78, %v114
    %v119 = vsub.f32 0.0, %v115
    %v120 = vsub.f32 0.0, %v116
    %v121 = vsub.f32 0.0, %v117
    %v122 = vsub.f32 0.0, %v118
    %v123 = vmul.f32 %v119, 1.442695
    %v124 = vpow.pop %v123
    %v125 = vmul.f32 %v120, 1.442695
    %v126 = vpow.pop %v125
    %v127 = vmul.f32 %v121, 1.442695
    %v128 = vpow.pop %v127
    %v129 = vmul.f32 %v122, 1.442695
    %v130 = vpow.pop %v129
    %v131 = vsub.f32 1.0, %v124
    %v132 = vsub.f32 1.0, %v126
    %v133 = vsub.f32 1.0, %v128
    %v134 = vsub.f32 1.0, %v130
    %v135 = vmul.f32 %v131, %v131
    %v136 = vmul.f32 %v132, %v132
    %v137 = vmul.f32 %v133, %v133
    %v138 = vmul.f32 %v134, %v134
    %v139 = vsel %vm47, 0.25, 0.75
    %v140 = vsel %vm48, 0.25, 0.75
    %v141 = vsel %vm49, 0.25, 0.75
    %v142 = vsel %vm50, 0.25, 0.75
    %v143 = vsub.f32 0.0, %v139
    %v144 = vsub.f32 0.0, %v140
    %v145 = vsub.f32 0.0, %v141
    %v146 = vsub.f32 0.0, %v142
    %v147 = vmul.f32 %v143, %v135
    %v148 = vmul.f32 %v144, %v136
    %v149 = vmul.f32 %v145, %v137
    %v150 = vmul.f32 %v146, %v138
    %v151 = vmul.f32 %v147, %v119
    %v152 = vmul.f32 %v148, %v120
    %v153 = vmul.f32 %v149, %v121
    %v154 = vmul.f32 %v150, %v122
    %155 = vst [vmem:[#allocation7] sm:$0xff] %v151
    %156 = vst [vmem:[#allocation7 + $0x8] sm:$0xff] %v152
    %157 = vst [vmem:[#allocation7 + $0x10] sm:$0xff] %v153
    %158 = vst [vmem:[#allocation7 + $0x18] sm:$0xff] %v154
    // Predicated region
    $region18: #{tpu_custom_call.1} parent=1 // pred_check
      _
    $region19: #{tpu_custom_call.1} parent=1 // pred_check_branch
      %160 = sbr.rel (0) target = $region21
    $region20: #{tpu_custom_call.1} parent=1 // pred_region
      %s162 = ssub.s32 512, 512
      %163 = vsyncadd [#allocation4], %s162
      %s164 = sshll.u32 [#allocation7], 4
      %s165 = int_to_ptr.vmem [resolvable:$true] %s164
      %170 = dma.vmem_to_hbm [thread:$0]  %s165, 512, %s2, [#allocation4], 128, 128, 8
    $region21: #{tpu_custom_call.1} parent=1 // pred_fallthru
      _
    // Predicated region
    $region22: #{tpu_custom_call.1} parent=1 // pred_check
      _
    $region23: #{tpu_custom_call.1} parent=1 // pred_check_branch
      %172 = sbr.rel (0) target = $region25
    $region24: #{tpu_custom_call.1} parent=1 // pred_region
      %173 = dma.done [#allocation4], 512
    $region25: #{tpu_custom_call.1} parent=1 // pred_fallthru
      _
    %174 = vsyncpa [#allocation3], 1
    %175 = vsyncpa [#allocation6], 1
    %176 = vsyncpa [#allocation4], 1

</llo_original>
